<compile_context>
chip_gen: v6e
topology: v6e:2x2x1
jax: 0.10.0
libtpu: 0.0.40
codegen_flags: <defaults>
</compile_context>

<pallas_src>
import jax
import jax.numpy as jnp
from jax.experimental import pallas as pl
from jax.experimental.pallas import tpu as pltpu

NUM_UNITS = 128            # hidden width (PyTorch module default)
LANE = 128                 # lane width: n_steps table padded to a multiple of this
SUB = 16                   # sublane alignment for the batch tile (bf16-safe)
MAX_TB = 1024              # batch tile cap (per-tile VMEM still < 2 MiB)
COMPUTE_DTYPE = jnp.bfloat16


def _round_up(x, m):
    return ((x + m - 1) // m) * m


def _cdiv(a, b):
    return -(-a // b)


def _choose_tiling(batch):
    """Roughly-equal, sublane-aligned batch tiles capped at MAX_TB rows.
    When more than one tile is needed, use an even tile count so v7x's two
    TensorCores each get the same number of 'parallel' grid steps."""
    b = _round_up(batch, SUB)
    n = _cdiv(b, MAX_TB)
    if n > 1 and n % 2:
        n += 1
    tb = _round_up(_cdiv(b, n), SUB)
    return tb, tb * n            # (tile rows, padded batch);  grid = n


def _mlp_kernel(x_ref, t_ref, tab_ref, w1_ref, w2_ref, w3_ref, w4_ref,
                b23_ref, b4_ref, o_ref):
    tb = x_ref.shape[0]
    nstep_pad = tab_ref.shape[0]

    # In-kernel embedding gather: exact one-hot (f32) matmul against the folded
    # table (emb @ W1_emb + b1).  Exact row selection; the extra MXU work is free
    # because the kernel is memory-bound.
    steps = jax.lax.broadcasted_iota(jnp.int32, (tb, nstep_pad), 1)
    onehot = (t_ref[...] == steps).astype(jnp.float32)
    e1 = jnp.dot(onehot, tab_ref[...], preferred_element_type=jnp.float32)

    b23 = b23_ref[...]

    # Layer 1: narrow-K x matmul (bf16 operands, f32 accumulate) + gathered
    # embedding/bias term, then ReLU.
    h = jnp.dot(x_ref[...], w1_ref[...], preferred_element_type=jnp.float32)
    h = jnp.maximum(h + e1, 0.0)

    # Layer 2: Linear(num_units -> num_units) + ReLU
    h = jnp.dot(h.astype(w2_ref.dtype), w2_ref[...],
                preferred_element_type=jnp.float32) + b23[0:1, :]
    h = jnp.maximum(h, 0.0)

    # Layer 3: Linear(num_units -> num_units) + ReLU
    h = jnp.dot(h.astype(w3_ref.dtype), w3_ref[...],
                preferred_element_type=jnp.float32) + b23[1:2, :]
    h = jnp.maximum(h, 0.0)

    # Layer 4: Linear(num_units -> dimension), no activation (narrow output).
    o_ref[...] = jnp.dot(h.astype(w4_ref.dtype), w4_ref[...],
                         preferred_element_type=jnp.float32) + b4_ref[...]


def prepare_params(params, dimension, num_units=NUM_UNITS,
                   compute_dtype=COMPUTE_DTYPE):
    """One-time packing: narrow pads, bf16 weight casts, and folding of the
    embedding table + b1 through the embedding half of W1 (exact, f32)."""
    xdim = _round_up(max(dimension, 1), 8)
    odim = _round_up(max(dimension, 1), 8)

    w1 = params["w1"].astype(jnp.float32)                 # (dim + num_units, num_units)
    w1x = jnp.zeros((xdim, num_units), compute_dtype)
    w1x = w1x.at[:dimension, :].set(w1[:dimension, :].astype(compute_dtype))

    # Folded gather table: emb @ W1_emb + b1  (exact f32, one-time).
    emb_tab = (params["emb"].astype(jnp.float32) @ w1[dimension:, :]
               + params["b1"].astype(jnp.float32).reshape(1, -1))
    n_steps = emb_tab.shape[0]
    nstep_pad = _round_up(n_steps, LANE)
    tab = jnp.zeros((nstep_pad, num_units), jnp.float32).at[:n_steps, :].set(emb_tab)

    w4 = jnp.zeros((num_units, odim), compute_dtype)
    w4 = w4.at[:, :dimension].set(params["w4"].astype(compute_dtype))
    b4 = jnp.zeros((1, odim), jnp.float32).at[:, :dimension].set(
        params["b4"].astype(jnp.float32).reshape(1, -1))

    b23 = jnp.concatenate(
        [params["b2"].reshape(1, -1), params["b3"].reshape(1, -1)],
        axis=0).astype(jnp.float32)

    return dict(
        w1x=w1x, tab=tab,
        w2=params["w2"].astype(compute_dtype),
        w3=params["w3"].astype(compute_dtype),
        w4=w4, b23=b23, b4=b4,
    )


def _forward_impl(prepped, x, t):
    B, dim = x.shape
    xdim, nu = prepped["w1x"].shape
    odim = prepped["w4"].shape[1]
    nstep_pad = prepped["tab"].shape[0]

    tb, b_pad = _choose_tiling(B)
    grid = (b_pad // tb,)

    # Tiny per-step glue: narrow pad + bf16 cast of x, (B,1) int32 timestep column.
    xp = jnp.pad(x.astype(COMPUTE_DTYPE), ((0, b_pad - B), (0, xdim - dim)))
    tp = jnp.pad(t.astype(jnp.int32).reshape(-1, 1), ((0, b_pad - B), (0, 0)))

    flops = b_pad * 2 * nu * (nstep_pad + xdim + nu + nu + odim)
    bytes_accessed = (
        b_pad * xdim * 2            # x (bf16)
        + b_pad * 4                 # t (int32)
        + b_pad * odim * 4          # out (f32)
        + nstep_pad * nu * 4        # folded embedding table (f32)
        + (xdim + 2 * nu) * nu * 2 + nu * odim * 2   # bf16 weights
        + 2 * nu * 4 + odim * 4)    # biases

    out = pl.pallas_call(
        _mlp_kernel,
        out_shape=jax.ShapeDtypeStruct((b_pad, odim), jnp.float32),
        grid=grid,
        in_specs=[
            pl.BlockSpec((tb, xdim), lambda i: (i, 0)),          # x tile (bf16, narrow)
            pl.BlockSpec((tb, 1), lambda i: (i, 0)),             # t tile (int32)
            pl.BlockSpec((nstep_pad, nu), lambda i: (0, 0)),     # folded emb table (f32)
            pl.BlockSpec((xdim, nu), lambda i: (0, 0)),          # W1_x
            pl.BlockSpec((nu, nu), lambda i: (0, 0)),            # W2
            pl.BlockSpec((nu, nu), lambda i: (0, 0)),            # W3
            pl.BlockSpec((nu, odim), lambda i: (0, 0)),          # W4 (narrow out)
            pl.BlockSpec((2, nu), lambda i: (0, 0)),             # stacked b2/b3
            pl.BlockSpec((1, odim), lambda i: (0, 0)),           # b4 (narrow)
        ],
        out_specs=pl.BlockSpec((tb, odim), lambda i: (i, 0)),
        compiler_params=pltpu.CompilerParams(
            dimension_semantics=("parallel",)),
        cost_estimate=pl.CostEstimate(
            flops=flops, transcendentals=0, bytes_accessed=bytes_accessed),
    )(xp, tp, prepped["tab"], prepped["w1x"], prepped["w2"], prepped["w3"],
      prepped["w4"], prepped["b23"], prepped["b4"])

    return out[:B, :dim]


mlp_diffusion_forward = jax.jit(_forward_impl)


def init_params(key, n_steps, dimension, num_units=NUM_UNITS):
    """Deterministic init mimicking PyTorch defaults (uniform +-1/sqrt(fan_in),
    N(0,1) for the embedding).  Weights stored as (in, out) so y = x @ W + b."""
    ks = jax.random.split(key, 9)

    def linear(kw, kb, fan_in, fan_out):
        bound = 1.0 / jnp.sqrt(fan_in)
        w = jax.random.uniform(kw, (fan_in, fan_out), jnp.float32, -bound, bound)
        b = jax.random.uniform(kb, (1, fan_out), jnp.float32, -bound, bound)
        return w, b

    emb = jax.random.normal(ks[0], (n_steps, num_units), jnp.float32)
    w1, b1 = linear(ks[1], ks[2], dimension + num_units, num_units)
    w2, b2 = linear(ks[3], ks[4], num_units, num_units)
    w3, b3 = linear(ks[5], ks[6], num_units, num_units)
    w4, b4 = linear(ks[7], ks[8], num_units, dimension)
    return dict(emb=emb, w1=w1, b1=b1, w2=w2, b2=b2, w3=w3, b3=b3, w4=w4, b4=b4)


def reference_forward(params, x, t):
    """Pure-JAX (full f32) reference of the PyTorch forward pass."""
    h = jnp.concatenate([x, params["emb"][t]], axis=1)
    h = jnp.maximum(h @ params["w1"] + params["b1"], 0.0)
    h = jnp.maximum(h @ params["w2"] + params["b2"], 0.0)
    h = jnp.maximum(h @ params["w3"] + params["b3"], 0.0)
    return h @ params["w4"] + params["b4"]


if __name__ == "__main__":
    n_steps = 100
    dimension = 3   # stands in for data.shape[1] of raw_data_3.npy (dataset not loaded)
    batch = 8

    key = jax.random.PRNGKey(0)
    k_params, k_x, k_t = jax.random.split(key, 3)

    params = init_params(k_params, n_steps, dimension)
    prepped = prepare_params(params, dimension)   # one-time pad / bf16 cast / emb+b1 fold

    x = jax.random.normal(k_x, (batch, dimension), jnp.float32)
    t = jax.random.randint(k_t, (batch,), 0, n_steps, jnp.int32)

    out = jax.block_until_ready(mlp_diffusion_forward(prepped, x, t))
    ref = jax.block_until_ready(reference_forward(params, x, t))

    assert out.shape == (batch, dimension), out.shape
    # bf16 matmul operands -> loosened tolerance vs the full-f32 reference.
    max_err = float(jnp.max(jnp.abs(out - ref)))
    assert jnp.allclose(out, ref, atol=5e-2, rtol=5e-2), (
        f"mismatch vs reference: max abs err {max_err}")
    print("KERNEL_OK")
</pallas_src>

<mosaic_0001>
module attributes {stable_mosaic.version = 11 : i64} {
  func.func @_mlp_kernel(%arg0: i32, %arg1: memref<16x8xbf16, #tpu.memory_space<vmem>>, %arg2: memref<16x1xi32, #tpu.memory_space<vmem>>, %arg3: memref<128x128xf32, #tpu.memory_space<vmem>>, %arg4: memref<8x128xbf16, #tpu.memory_space<vmem>>, %arg5: memref<128x128xbf16, #tpu.memory_space<vmem>>, %arg6: memref<128x128xbf16, #tpu.memory_space<vmem>>, %arg7: memref<128x8xbf16, #tpu.memory_space<vmem>>, %arg8: memref<2x128xf32, #tpu.memory_space<vmem>>, %arg9: memref<1x8xf32, #tpu.memory_space<vmem>>, %arg10: memref<16x8xf32, #tpu.memory_space<vmem>>) attributes {dimension_semantics = [#tpu.dimension_semantics<parallel>], iteration_bounds = array<i64: 1>, scalar_prefetch = 0 : i64, scratch_operands = 0 : i64, tpu.core_type = #tpu.core_type<tc>, window_params = [{transform_indices = @transform_0, window_bounds = array<i64: 16, 8>}, {transform_indices = @transform_1, window_bounds = array<i64: 16, 1>}, {pipeline_mode = #tpu.pipeline_mode<synchronous>, transform_indices = @transform_2, window_bounds = array<i64: 128, 128>}, {pipeline_mode = #tpu.pipeline_mode<synchronous>, transform_indices = @transform_3, window_bounds = array<i64: 8, 128>}, {pipeline_mode = #tpu.pipeline_mode<synchronous>, transform_indices = @transform_4, window_bounds = array<i64: 128, 128>}, {pipeline_mode = #tpu.pipeline_mode<synchronous>, transform_indices = @transform_5, window_bounds = array<i64: 128, 128>}, {pipeline_mode = #tpu.pipeline_mode<synchronous>, transform_indices = @transform_6, window_bounds = array<i64: 128, 8>}, {pipeline_mode = #tpu.pipeline_mode<synchronous>, transform_indices = @transform_7, window_bounds = array<i64: 2, 128>}, {pipeline_mode = #tpu.pipeline_mode<synchronous>, transform_indices = @transform_8, window_bounds = array<i64: 1, 8>}, {transform_indices = @transform_9, window_bounds = array<i64: 16, 8>}]} {
    %0 = tpu.iota {dimensions = array<i32: 1>} : vector<16x128xi32>
    %c0 = arith.constant 0 : index
    %c0_0 = arith.constant 0 : index
    %1 = vector.load %arg2[%c0, %c0_0] : memref<16x1xi32, #tpu.memory_space<vmem>>, vector<16x1xi32>
    %2 = vector.broadcast %1 : vector<16x1xi32> to vector<16x128xi32>
    %3 = arith.cmpi eq, %2, %0 : vector<16x128xi32>
    %4 = arith.extui %3 : vector<16x128xi1> to vector<16x128xi32>
    %5 = arith.sitofp %4 : vector<16x128xi32> to vector<16x128xf32>
    %c0_1 = arith.constant 0 : index
    %c0_2 = arith.constant 0 : index
    %6 = vector.load %arg3[%c0_1, %c0_2] : memref<128x128xf32, #tpu.memory_space<vmem>>, vector<128x128xf32>
    %cst = arith.constant dense<0.000000e+00> : vector<16x128xf32>
    %7 = tpu.matmul %5, %6, %cst {dimension_numbers = #tpu.dot_dimension_numbers<[1], [0], [0], [1], [0, 0, 1, 1], [], []>} : vector<16x128xf32>, vector<128x128xf32>, vector<16x128xf32> -> vector<16x128xf32>
    %c0_3 = arith.constant 0 : index
    %c0_4 = arith.constant 0 : index
    %8 = vector.load %arg8[%c0_3, %c0_4] : memref<2x128xf32, #tpu.memory_space<vmem>>, vector<2x128xf32>
    %c0_5 = arith.constant 0 : index
    %c0_6 = arith.constant 0 : index
    %9 = vector.load %arg1[%c0_5, %c0_6] : memref<16x8xbf16, #tpu.memory_space<vmem>>, vector<16x8xbf16>
    %c0_7 = arith.constant 0 : index
    %c0_8 = arith.constant 0 : index
    %10 = vector.load %arg4[%c0_7, %c0_8] : memref<8x128xbf16, #tpu.memory_space<vmem>>, vector<8x128xbf16>
    %cst_9 = arith.constant dense<0.000000e+00> : vector<16x128xf32>
    %11 = tpu.matmul %9, %10, %cst_9 {dimension_numbers = #tpu.dot_dimension_numbers<[1], [0], [0], [1], [0, 0, 1, 1], [], []>} : vector<16x8xbf16>, vector<8x128xbf16>, vector<16x128xf32> -> vector<16x128xf32>
    %12 = arith.addf %11, %7 : vector<16x128xf32>
    %cst_10 = arith.constant 0.000000e+00 : f32
    %13 = vector.broadcast %cst_10 : f32 to vector<16x128xf32>
    %14 = arith.maximumf %12, %13 : vector<16x128xf32>
    %15 = arith.truncf %14 : vector<16x128xf32> to vector<16x128xbf16>
    %c0_11 = arith.constant 0 : index
    %c0_12 = arith.constant 0 : index
    %16 = vector.load %arg5[%c0_11, %c0_12] : memref<128x128xbf16, #tpu.memory_space<vmem>>, vector<128x128xbf16>
    %cst_13 = arith.constant dense<0.000000e+00> : vector<16x128xf32>
    %17 = tpu.matmul %15, %16, %cst_13 {dimension_numbers = #tpu.dot_dimension_numbers<[1], [0], [0], [1], [0, 0, 1, 1], [], []>} : vector<16x128xbf16>, vector<128x128xbf16>, vector<16x128xf32> -> vector<16x128xf32>
    %18 = vector.extract_strided_slice %8 {offsets = [0, 0], sizes = [1, 128], strides = [1, 1]} : vector<2x128xf32> to vector<1x128xf32>
    %19 = vector.broadcast %18 : vector<1x128xf32> to vector<16x128xf32>
    %20 = arith.addf %17, %19 : vector<16x128xf32>
    %cst_14 = arith.constant 0.000000e+00 : f32
    %21 = vector.broadcast %cst_14 : f32 to vector<16x128xf32>
    %22 = arith.maximumf %20, %21 : vector<16x128xf32>
    %23 = arith.truncf %22 : vector<16x128xf32> to vector<16x128xbf16>
    %c0_15 = arith.constant 0 : index
    %c0_16 = arith.constant 0 : index
    %24 = vector.load %arg6[%c0_15, %c0_16] : memref<128x128xbf16, #tpu.memory_space<vmem>>, vector<128x128xbf16>
    %cst_17 = arith.constant dense<0.000000e+00> : vector<16x128xf32>
    %25 = tpu.matmul %23, %24, %cst_17 {dimension_numbers = #tpu.dot_dimension_numbers<[1], [0], [0], [1], [0, 0, 1, 1], [], []>} : vector<16x128xbf16>, vector<128x128xbf16>, vector<16x128xf32> -> vector<16x128xf32>
    %26 = vector.extract_strided_slice %8 {offsets = [1, 0], sizes = [1, 128], strides = [1, 1]} : vector<2x128xf32> to vector<1x128xf32>
    %27 = vector.broadcast %26 : vector<1x128xf32> to vector<16x128xf32>
    %28 = arith.addf %25, %27 : vector<16x128xf32>
    %cst_18 = arith.constant 0.000000e+00 : f32
    %29 = vector.broadcast %cst_18 : f32 to vector<16x128xf32>
    %30 = arith.maximumf %28, %29 : vector<16x128xf32>
    %31 = arith.truncf %30 : vector<16x128xf32> to vector<16x128xbf16>
    %c0_19 = arith.constant 0 : index
    %c0_20 = arith.constant 0 : index
    %32 = vector.load %arg7[%c0_19, %c0_20] : memref<128x8xbf16, #tpu.memory_space<vmem>>, vector<128x8xbf16>
    %cst_21 = arith.constant dense<0.000000e+00> : vector<16x8xf32>
    %33 = tpu.matmul %31, %32, %cst_21 {dimension_numbers = #tpu.dot_dimension_numbers<[1], [0], [0], [1], [0, 0, 1, 1], [], []>} : vector<16x128xbf16>, vector<128x8xbf16>, vector<16x8xf32> -> vector<16x8xf32>
    %c0_22 = arith.constant 0 : index
    %c0_23 = arith.constant 0 : index
    %34 = vector.load %arg9[%c0_22, %c0_23] : memref<1x8xf32, #tpu.memory_space<vmem>>, vector<1x8xf32>
    %35 = vector.broadcast %34 : vector<1x8xf32> to vector<16x8xf32>
    %36 = arith.addf %33, %35 : vector<16x8xf32>
    %c0_24 = arith.constant 0 : index
    %c0_25 = arith.constant 0 : index
    %37 = vector.load %arg10[%c0_24, %c0_25] : memref<16x8xf32, #tpu.memory_space<vmem>>, vector<16x8xf32>
    tpu.vector_store %arg10[%c0_24, %c0_25], %36 {strides = array<i32>} : memref<16x8xf32, #tpu.memory_space<vmem>>, vector<16x8xf32>,
    return
  }
  func.func @transform_0(%arg0: i32) -> (i32, i32) {
    %c0_i32 = arith.constant 0 : i32
    %c0_i32_0 = arith.constant 0 : i32
    return %arg0, %c0_i32 : i32, i32
  }
  func.func @transform_1(%arg0: i32) -> (i32, i32) {
    %c0_i32 = arith.constant 0 : i32
    %c0_i32_0 = arith.constant 0 : i32
    return %arg0, %c0_i32 : i32, i32
  }
  func.func @transform_2(%arg0: i32) -> (i32, i32) {
    %c0_i32 = arith.constant 0 : i32
    %c0_i32_0 = arith.constant 0 : i32
    %c0_i32_1 = arith.constant 0 : i32
    return %c0_i32, %c0_i32_0 : i32, i32
  }
  func.func @transform_3(%arg0: i32) -> (i32, i32) {
    %c0_i32 = arith.constant 0 : i32
    %c0_i32_0 = arith.constant 0 : i32
    %c0_i32_1 = arith.constant 0 : i32
    return %c0_i32, %c0_i32_0 : i32, i32
  }
  func.func @transform_4(%arg0: i32) -> (i32, i32) {
    %c0_i32 = arith.constant 0 : i32
    %c0_i32_0 = arith.constant 0 : i32
    %c0_i32_1 = arith.constant 0 : i32
    return %c0_i32, %c0_i32_0 : i32, i32
  }
  func.func @transform_5(%arg0: i32) -> (i32, i32) {
    %c0_i32 = arith.constant 0 : i32
    %c0_i32_0 = arith.constant 0 : i32
    %c0_i32_1 = arith.constant 0 : i32
    return %c0_i32, %c0_i32_0 : i32, i32
  }
  func.func @transform_6(%arg0: i32) -> (i32, i32) {
    %c0_i32 = arith.constant 0 : i32
    %c0_i32_0 = arith.constant 0 : i32
    %c0_i32_1 = arith.constant 0 : i32
    return %c0_i32, %c0_i32_0 : i32, i32
  }
  func.func @transform_7(%arg0: i32) -> (i32, i32) {
    %c0_i32 = arith.constant 0 : i32
    %c0_i32_0 = arith.constant 0 : i32
    %c0_i32_1 = arith.constant 0 : i32
    return %c0_i32, %c0_i32_0 : i32, i32
  }
  func.func @transform_8(%arg0: i32) -> (i32, i32) {
    %c0_i32 = arith.constant 0 : i32
    %c0_i32_0 = arith.constant 0 : i32
    %c0_i32_1 = arith.constant 0 : i32
    return %c0_i32, %c0_i32_0 : i32, i32
  }
  func.func @transform_9(%arg0: i32) -> (i32, i32) {
    %c0_i32 = arith.constant 0 : i32
    %c0_i32_0 = arith.constant 0 : i32
    return %arg0, %c0_i32 : i32, i32
  }
}

</mosaic_0001>

<llo_original>
// kernel: _forward_impl.1
$region0: #{_forward_impl.1}
  #allocation0 [shape = 'u32[]', space=smem, size = 0x4, offset = 0x4, fixed_abs, tag = 'smem constant byte address 0x4 - core index']
  #allocation1 [shape = 'u32[144,128]{1,0:T(1,128)}', space=vmem, size = 0x12000, scoped, tag = 'internal scratch']
  %s0 = inlined_call_operand.vmem [shape: bf16[16,8], index: 0, kind: input, shape index: {}]
  %s1 = inlined_call_operand.vmem [shape: s32[16,1], index: 1, kind: input, shape index: {}]
  %s2 = inlined_call_operand.vmem [shape: f32[128,128], index: 2, kind: input, shape index: {}]
  %s3 = inlined_call_operand.hbm [shape: bf16[8,128], index: 3, kind: input, shape index: {}]
  %s4 = inlined_call_operand.hbm [shape: bf16[128,128], index: 4, kind: input, shape index: {}]
  %s5 = inlined_call_operand.hbm [shape: bf16[128,128], index: 5, kind: input, shape index: {}]
  %s6 = inlined_call_operand.vmem [shape: bf16[128,8], index: 6, kind: input, shape index: {}]
  %s7 = inlined_call_operand.hbm [shape: f32[2,128], index: 7, kind: input, shape index: {}]
  %s8 = inlined_call_operand.hbm [shape: f32[1,8], index: 8, kind: input, shape index: {}]
  %s9 = inlined_call_operand.vmem [shape: f32[16,8], index: 9, kind: output, shape index: {}]
  %s10 = sld [smem:[#allocation0]]
  $region66: #{_forward_impl.1} parent=0
    _
  %s12 = ssub.s32 1, %s10
  %s13 = scalar_select 0, %s12, %s10
  $region1: #{_forward_impl.1} parent=0
    #allocation2 [shape = 'u8[2048]{0}', space=vmem, size = 0x800, scoped, tag = 'input window, operand 3, single buffered']
    #allocation3 [shape = 's32[1]{0}', space=sflag, size = 0x4, scoped, tag = 'scoped memory for _forward_impl.1']
    #allocation4 [shape = 'u8[32768]{0}', space=vmem, size = 0x8000, scoped, tag = 'input window, operand 4, single buffered']
    #allocation5 [shape = 's32[1]{0}', space=sflag, size = 0x4, scoped, tag = 'scoped memory for _forward_impl.1']
    #allocation6 [shape = 'u8[32768]{0}', space=vmem, size = 0x8000, scoped, tag = 'input window, operand 5, single buffered']
    #allocation7 [shape = 'u8[1024]{0}', space=vmem, size = 0x400, scoped, tag = 'input window, operand 7, single buffered']
    #allocation8 [shape = 's32[1]{0}', space=sflag, size = 0x4, scoped, tag = 'scoped memory for _forward_impl.1']
    #allocation9 [shape = 'u8[512]{0}', space=vmem, size = 0x400, scoped, tag = 'input window, operand 8, single buffered']
    %14 = vsyncpa [#allocation3], 0
    %15 = vsyncpa [#allocation5], 0
    %16 = vsyncpa [#allocation8], 0
    // Predicated region
    $region2: #{_forward_impl.1} parent=1 // pred_check
      _
    $region3: #{_forward_impl.1} parent=1 // pred_check_branch
      %18 = sbr.rel (0) target = $region5
    $region4: #{_forward_impl.1} parent=1 // pred_region
      _
    $region5: #{_forward_impl.1} parent=1 // pred_fallthru
      _
    // Predicated region
    $region6: #{_forward_impl.1} parent=1 // pred_check
      _
    $region7: #{_forward_impl.1} parent=1 // pred_check_branch
      %20 = sbr.rel (0) target = $region9
    $region8: #{_forward_impl.1} parent=1 // pred_region
      _
    $region9: #{_forward_impl.1} parent=1 // pred_fallthru
      _
    // Predicated region
    $region10: #{_forward_impl.1} parent=1 // pred_check
      _
    $region11: #{_forward_impl.1} parent=1 // pred_check_branch
      %22 = sbr.rel (0) target = $region13
    $region12: #{_forward_impl.1} parent=1 // pred_region
      _
    $region13: #{_forward_impl.1} parent=1 // pred_fallthru
      _
    // Predicated region
    $region14: #{_forward_impl.1} parent=1 // pred_check
      _
    $region15: #{_forward_impl.1} parent=1 // pred_check_branch
      %24 = sbr.rel (0) target = $region17
    $region16: #{_forward_impl.1} parent=1 // pred_region
      %s26 = ssub.s32 64, 64
      %27 = vsyncadd [#allocation3], %s26
      %s29 = sshll.u32 [#allocation2], 4
      %s30 = int_to_ptr.vmem [resolvable:$true] %s29
      %32 = dma.hbm_to_vmem [thread:$0]  %s3, 64, %s30, [#allocation3]
    $region17: #{_forward_impl.1} parent=1 // pred_fallthru
      _
    // Predicated region
    $region18: #{_forward_impl.1} parent=1 // pred_check
      _
    $region19: #{_forward_impl.1} parent=1 // pred_check_branch
      %34 = sbr.rel (0) target = $region21
    $region20: #{_forward_impl.1} parent=1 // pred_region
      %s36 = ssub.s32 1024, 1024
      %37 = vsyncadd [#allocation5], %s36
      %s38 = sshll.u32 [#allocation4], 4
      %s39 = int_to_ptr.vmem [resolvable:$true] %s38
      %44 = dma.hbm_to_vmem [thread:$0]  %s4, 1024, %s39, [#allocation5], 64, 64, 4
    $region21: #{_forward_impl.1} parent=1 // pred_fallthru
      _
    // Predicated region
    $region22: #{_forward_impl.1} parent=1 // pred_check
      _
    $region23: #{_forward_impl.1} parent=1 // pred_check_branch
      %46 = sbr.rel (0) target = $region25
    $region24: #{_forward_impl.1} parent=1 // pred_region
      %s48 = ssub.s32 1024, 1024
      %49 = vsyncadd [#allocation5], %s48
      %s50 = sshll.u32 [#allocation6], 4
      %s51 = int_to_ptr.vmem [resolvable:$true] %s50
      %56 = dma.hbm_to_vmem [thread:$0]  %s5, 1024, %s51, [#allocation5], 64, 64, 4
    $region25: #{_forward_impl.1} parent=1 // pred_fallthru
      _
    // Predicated region
    $region26: #{_forward_impl.1} parent=1 // pred_check
      _
    $region27: #{_forward_impl.1} parent=1 // pred_check_branch
      %58 = sbr.rel (0) target = $region29
    $region28: #{_forward_impl.1} parent=1 // pred_region
      _
    $region29: #{_forward_impl.1} parent=1 // pred_fallthru
      _
    // Predicated region
    $region30: #{_forward_impl.1} parent=1 // pred_check
      _
    $region31: #{_forward_impl.1} parent=1 // pred_check_branch
      %60 = sbr.rel (0) target = $region33
    $region32: #{_forward_impl.1} parent=1 // pred_region
      %s62 = ssub.s32 32, 32
      %63 = vsyncadd [#allocation8], %s62
      %s65 = sshll.u32 [#allocation7], 4
      %s66 = int_to_ptr.vmem [resolvable:$true] %s65
      %68 = dma.hbm_to_vmem [thread:$0]  %s7, 32, %s66, [#allocation8]
    $region33: #{_forward_impl.1} parent=1 // pred_fallthru
      _
    // Predicated region
    $region34: #{_forward_impl.1} parent=1 // pred_check
      _
    $region35: #{_forward_impl.1} parent=1 // pred_check_branch
      %70 = sbr.rel (0) target = $region37
    $region36: #{_forward_impl.1} parent=1 // pred_region
      %s72 = ssub.s32 16, 16
      %73 = vsyncadd [#allocation8], %s72
      %s75 = sshll.u32 [#allocation9], 4
      %s76 = int_to_ptr.vmem [resolvable:$true] %s75
      %78 = dma.hbm_to_vmem [thread:$0]  %s8, 16, %s76, [#allocation8]
    $region37: #{_forward_impl.1} parent=1 // pred_fallthru
      _
    // Predicated region
    $region38: #{_forward_impl.1} parent=1 // pred_check
      _
    $region39: #{_forward_impl.1} parent=1 // pred_check_branch
      %80 = sbr.rel (0) target = $region41
    $region40: #{_forward_impl.1} parent=1 // pred_region
      %81 = dma.done [#allocation3], 64
    $region41: #{_forward_impl.1} parent=1 // pred_fallthru
      _
    // Predicated region
    $region42: #{_forward_impl.1} parent=1 // pred_check
      _
    $region43: #{_forward_impl.1} parent=1 // pred_check_branch
      %83 = sbr.rel (0) target = $region45
    $region44: #{_forward_impl.1} parent=1 // pred_region
      %84 = dma.done [#allocation5], 1024
    $region45: #{_forward_impl.1} parent=1 // pred_fallthru
      _
    // Predicated region
    $region46: #{_forward_impl.1} parent=1 // pred_check
      _
    $region47: #{_forward_impl.1} parent=1 // pred_check_branch
      %86 = sbr.rel (0) target = $region49
    $region48: #{_forward_impl.1} parent=1 // pred_region
      %87 = dma.done [#allocation5], 1024
    $region49: #{_forward_impl.1} parent=1 // pred_fallthru
      _
    // Predicated region
    $region50: #{_forward_impl.1} parent=1 // pred_check
      _
    $region51: #{_forward_impl.1} parent=1 // pred_check_branch
      %89 = sbr.rel (0) target = $region53
    $region52: #{_forward_impl.1} parent=1 // pred_region
      %90 = dma.done [#allocation8], 32
    $region53: #{_forward_impl.1} parent=1 // pred_fallthru
      _
    // Predicated region
    $region54: #{_forward_impl.1} parent=1 // pred_check
      _
    $region55: #{_forward_impl.1} parent=1 // pred_check_branch
      %92 = sbr.rel (0) target = $region57
    $region56: #{_forward_impl.1} parent=1 // pred_region
      %93 = dma.done [#allocation8], 16
    $region57: #{_forward_impl.1} parent=1 // pred_fallthru
      _
    %v95 = vlaneseq
    %v96 = vand.u32 %v95, 127
    %v97 = vld [vmem:[%s1] sm:$0xff]
    %v98 = vld [vmem:[%s1 + $0x8] sm:$0xff]
    %99 = vset.pattern.permute.xlu0 0
    %100 = vperm.xlu0 %99, %v97
    %v101 = vpop.permute.xlu0 %100
    %102 = vset.pattern.permute.xlu0 0
    %103 = vperm.xlu0 %102, %v98
    %v104 = vpop.permute.xlu0 %103
    %vm105 = vcmp.eq.s32.totalorder %v101, %v96
    %vm106 = vcmp.eq.s32.totalorder %v104, %v96
    %v107 = vsel %vm105, 1, 0
    %v108 = vsel %vm106, 1, 0
    %v109 = vcvt.s32.f32 %v107
    %v110 = vcvt.s32.f32 %v108
    %v111 = vld [vmem:[%s2] sm:$0xff]
    %v112 = vld [vmem:[%s2 + $0x8] sm:$0xff]
    %v113 = vld [vmem:[%s2 + $0x10] sm:$0xff]
    %v114 = vld [vmem:[%s2 + $0x18] sm:$0xff]
    %v115 = vld [vmem:[%s2 + $0x20] sm:$0xff]
    %v116 = vld [vmem:[%s2 + $0x28] sm:$0xff]
    %v117 = vld [vmem:[%s2 + $0x30] sm:$0xff]
    %v118 = vld [vmem:[%s2 + $0x38] sm:$0xff]
    %v119 = vld [vmem:[%s2 + $0x40] sm:$0xff]
    %v120 = vld [vmem:[%s2 + $0x48] sm:$0xff]
    %v121 = vld [vmem:[%s2 + $0x50] sm:$0xff]
    %v122 = vld [vmem:[%s2 + $0x58] sm:$0xff]
    %v123 = vld [vmem:[%s2 + $0x60] sm:$0xff]
    %v124 = vld [vmem:[%s2 + $0x68] sm:$0xff]
    %v125 = vld [vmem:[%s2 + $0x70] sm:$0xff]
    %v126 = vld [vmem:[%s2 + $0x78] sm:$0xff]
    %127 = vmatprep.subr.mxu0 0.0
    %128 = vmatpush1.msra.mxu0 %v126
    %129 = vmatprep.subr.mxu0 0.0
    %130 = vmatpush1.msra.mxu0 %v125
    %131 = vmatprep.subr.mxu0 0.0
    %132 = vmatpush1.msra.mxu0 %v124
    %133 = vmatprep.subr.mxu0 0.0
    %134 = vmatpush1.msra.mxu0 %v123
    %135 = vmatprep.subr.mxu0 0.0
    %136 = vmatpush1.msra.mxu0 %v122
    %137 = vmatprep.subr.mxu0 0.0
    %138 = vmatpush1.msra.mxu0 %v121
    %139 = vmatprep.subr.mxu0 0.0
    %140 = vmatpush1.msra.mxu0 %v120
    %141 = vmatprep.subr.mxu0 0.0
    %142 = vmatpush1.msra.mxu0 %v119
    %143 = vmatprep.subr.mxu0 0.0
    %144 = vmatpush1.msra.mxu0 %v118
    %145 = vmatprep.subr.mxu0 0.0
    %146 = vmatpush1.msra.mxu0 %v117
    %147 = vmatprep.subr.mxu0 0.0
    %148 = vmatpush1.msra.mxu0 %v116
    %149 = vmatprep.subr.mxu0 0.0
    %150 = vmatpush1.msra.mxu0 %v115
    %151 = vmatprep.subr.mxu0 0.0
    %152 = vmatpush1.msra.mxu0 %v114
    %153 = vmatprep.subr.mxu0 0.0
    %154 = vmatpush1.msra.mxu0 %v113
    %155 = vmatprep.subr.mxu0 0.0
    %156 = vmatpush1.msra.mxu0 %v112
    %157 = vmatprep.subr.mxu0 0.0
    %158 = vmatpush1.msra.mxu0 %v111
    %159 = vmatprep.subr.mxu0 0.0
    %160 = vmatpush2.msra.mxu0 0.0
    %161 = vmatprep.subr.mxu0 0.0
    %162 = vmatpush2.msra.mxu0 0.0
    %163 = vmatprep.subr.mxu0 0.0
    %164 = vmatpush2.msra.mxu0 0.0
    %165 = vmatprep.subr.mxu0 0.0
    %166 = vmatpush2.msra.mxu0 0.0
    %167 = vmatprep.subr.mxu0 0.0
    %168 = vmatpush2.msra.mxu0 0.0
    %169 = vmatprep.subr.mxu0 0.0
    %170 = vmatpush2.msra.mxu0 0.0
    %171 = vmatprep.subr.mxu0 0.0
    %172 = vmatpush2.msra.mxu0 0.0
    %173 = vmatprep.subr.mxu0 0.0
    %174 = vmatpush2.msra.mxu0 0.0
    %175 = vmatprep.subr.mxu0 0.0
    %176 = vmatpush2.msra.mxu0 0.0
    %177 = vmatprep.subr.mxu0 0.0
    %178 = vmatpush2.msra.mxu0 0.0
    %179 = vmatprep.subr.mxu0 0.0
    %180 = vmatpush2.msra.mxu0 0.0
    %181 = vmatprep.subr.mxu0 0.0
    %182 = vmatpush2.msra.mxu0 0.0
    %183 = vmatprep.subr.mxu0 0.0
    %184 = vmatpush2.msra.mxu0 0.0
    %185 = vmatprep.subr.mxu0 0.0
    %186 = vmatpush2.msra.mxu0 0.0
    %187 = vmatprep.subr.mxu0 0.0
    %188 = vmatpush2.msra.mxu0 0.0
    %189 = vmatprep.subr.mxu0 0.0
    %190 = vmatpush2.msra.mxu0 0.0
    %191 = vmatprep.mubr.f32.mxu0 0.0
    %192 = vmatmul.mubr.f32.gmra.mxu0 %v109
    %v193 = vpop.f32.mrf.mxu0
    %v194 = vadd.f32 0.0, %v193
    %v195 = vpop.f32.mrf.mxu0
    %196 = vmatprep.mubr.f32.mxu0 0.0
    %197 = vmatmul.mubr.f32.gmra.mxu0 %v110
    %v198 = vpop.f32.mrf.mxu0
    %v199 = vadd.f32 0.0, %v198
    %v200 = vpop.f32.mrf.mxu0
    %201 = vdwg.mxu0
    %v202 = vld [vmem:[#allocation7] sm:$0x3]
    %v203 = vld [vmem:[%s0] sm:$0xf]
    %v204 = vld [vmem:[%s0 + $0x4] sm:$0xf]
    %v205 = vld [vmem:[#allocation2] sm:$0xf]
    %v208 = vunpack.c.l.b16 %v203
    %v209 = vunpack.c.l.b16 %v204
    %v210 = vpack.c.b16 %v209, %v208
    %vm211 = vcmask 64512
    %v213 = vsel %vm211, %v210, 0
    %vm215 = vcmask 1043456
    %v217 = vsel %vm215, %v205, 0
    %219 = vmatprep.subr.bf16.mxu0 0
    %220 = vmatpush1.bf16.msra.mxu0 0
    %221 = vmatprep.subr.bf16.mxu0 0
    %222 = vmatpush1.bf16.msra.mxu0 0
    %223 = vmatprep.subr.bf16.mxu0 0
    %224 = vmatpush1.bf16.msra.mxu0 0
    %225 = vmatprep.subr.bf16.mxu0 0
    %226 = vmatpush1.bf16.msra.mxu0 0
    %227 = vmatprep.subr.bf16.mxu0 0
    %228 = vmatpush1.bf16.msra.mxu0 0
    %229 = vmatprep.subr.bf16.mxu0 0
    %230 = vmatpush1.bf16.msra.mxu0 0
    %231 = vmatprep.subr.bf16.mxu0 0
    %232 = vmatpush1.bf16.msra.mxu0 0
    %233 = vmatprep.subr.bf16.mxu0 0
    %234 = vmatpush1.bf16.msra.mxu0 %v217
    %235 = vmatprep.subr.bf16.mxu0 0
    %236 = vmatpush2.bf16.msra.mxu0 0
    %237 = vmatprep.subr.bf16.mxu0 0
    %238 = vmatpush2.bf16.msra.mxu0 0
    %239 = vmatprep.subr.bf16.mxu0 0
    %240 = vmatpush2.bf16.msra.mxu0 0
    %241 = vmatprep.subr.bf16.mxu0 0
    %242 = vmatpush2.bf16.msra.mxu0 0
    %243 = vmatprep.subr.bf16.mxu0 0
    %244 = vmatpush2.bf16.msra.mxu0 0
    %245 = vmatprep.subr.bf16.mxu0 0
    %246 = vmatpush2.bf16.msra.mxu0 0
    %247 = vmatprep.subr.bf16.mxu0 0
    %248 = vmatpush2.bf16.msra.mxu0 0
    %249 = vmatprep.subr.bf16.mxu0 0
    %250 = vmatpush2.bf16.msra.mxu0 0
    %251 = vmatprep.mubr.bf16.mxu0 0
    %252 = vmatmul.mubr.bf16.gmra.mxu0 %v213
    %v253 = vpop.f32.mrf.mxu0
    %v254 = vadd.f32 %v194, %v253
    %v255 = vpop.f32.mrf.mxu0
    %v256 = vpop.f32.mrf.mxu0
    %v257 = vadd.f32 %v199, %v256
    %v258 = vpop.f32.mrf.mxu0
    %259 = vdwg.mxu0
    %v260 = vmax.f32 %v254, 0.0
    %v261 = vmax.f32 %v257, 0.0
    %v262 = vpack.c.bf16 %v261, %v260
    %v263 = vld [vmem:[#allocation4] sm:$0xf]
    %v264 = vld [vmem:[#allocation4 + $0x4] sm:$0xf]
    %v265 = vld [vmem:[#allocation4 + $0x8] sm:$0xf]
    %v266 = vld [vmem:[#allocation4 + $0xc] sm:$0xf]
    %v267 = vld [vmem:[#allocation4 + $0x10] sm:$0xf]
    %v268 = vld [vmem:[#allocation4 + $0x14] sm:$0xf]
    %v269 = vld [vmem:[#allocation4 + $0x18] sm:$0xf]
    %v270 = vld [vmem:[#allocation4 + $0x1c] sm:$0xf]
    %v271 = vld [vmem:[#allocation4 + $0x20] sm:$0xf]
    %v272 = vld [vmem:[#allocation4 + $0x24] sm:$0xf]
    %v273 = vld [vmem:[#allocation4 + $0x28] sm:$0xf]
    %v274 = vld [vmem:[#allocation4 + $0x2c] sm:$0xf]
    %v275 = vld [vmem:[#allocation4 + $0x30] sm:$0xf]
    %v276 = vld [vmem:[#allocation4 + $0x34] sm:$0xf]
    %v277 = vld [vmem:[#allocation4 + $0x38] sm:$0xf]
    %v278 = vld [vmem:[#allocation4 + $0x3c] sm:$0xf]
    %v279 = vlaneseq
    %v280 = vshrl.u32 %v279, 7
    %v281 = vsub.s32 0, %v280
    %v282 = vrot.slane %v202, %v281
    %v299 = vunpack.c.l.b16 %v263
    %v300 = vunpack.c.l.b16 %v264
    %v301 = vunpack.c.l.b16 %v265
    %v302 = vunpack.c.l.b16 %v266
    %v303 = vunpack.c.l.b16 %v267
    %v304 = vunpack.c.l.b16 %v268
    %v305 = vunpack.c.l.b16 %v269
    %v306 = vunpack.c.l.b16 %v270
    %v307 = vunpack.c.l.b16 %v271
    %v308 = vunpack.c.l.b16 %v272
    %v309 = vunpack.c.l.b16 %v273
    %v310 = vunpack.c.l.b16 %v274
    %v311 = vunpack.c.l.b16 %v275
    %v312 = vunpack.c.l.b16 %v276
    %v313 = vunpack.c.l.b16 %v277
    %v314 = vunpack.c.l.b16 %v278
    %v315 = vpack.c.b16 %v300, %v299
    %v316 = vpack.c.b16 %v302, %v301
    %v317 = vpack.c.b16 %v304, %v303
    %v318 = vpack.c.b16 %v306, %v305
    %v319 = vpack.c.b16 %v308, %v307
    %v320 = vpack.c.b16 %v310, %v309
    %v321 = vpack.c.b16 %v312, %v311
    %v322 = vpack.c.b16 %v314, %v313
    %331 = vmatprep.subr.bf16.mxu0 0
    %332 = vmatpush1.bf16.msra.mxu0 %v322
    %333 = vmatprep.subr.bf16.mxu0 0
    %334 = vmatpush1.bf16.msra.mxu0 %v321
    %335 = vmatprep.subr.bf16.mxu0 0
    %336 = vmatpush1.bf16.msra.mxu0 %v320
    %337 = vmatprep.subr.bf16.mxu0 0
    %338 = vmatpush1.bf16.msra.mxu0 %v319
    %339 = vmatprep.subr.bf16.mxu0 0
    %340 = vmatpush1.bf16.msra.mxu0 %v318
    %341 = vmatprep.subr.bf16.mxu0 0
    %342 = vmatpush1.bf16.msra.mxu0 %v317
    %343 = vmatprep.subr.bf16.mxu0 0
    %344 = vmatpush1.bf16.msra.mxu0 %v316
    %345 = vmatprep.subr.bf16.mxu0 0
    %346 = vmatpush1.bf16.msra.mxu0 %v315
    %347 = vmatprep.subr.bf16.mxu0 0
    %348 = vmatpush2.bf16.msra.mxu0 0
    %349 = vmatprep.subr.bf16.mxu0 0
    %350 = vmatpush2.bf16.msra.mxu0 0
    %351 = vmatprep.subr.bf16.mxu0 0
    %352 = vmatpush2.bf16.msra.mxu0 0
    %353 = vmatprep.subr.bf16.mxu0 0
    %354 = vmatpush2.bf16.msra.mxu0 0
    %355 = vmatprep.subr.bf16.mxu0 0
    %356 = vmatpush2.bf16.msra.mxu0 0
    %357 = vmatprep.subr.bf16.mxu0 0
    %358 = vmatpush2.bf16.msra.mxu0 0
    %359 = vmatprep.subr.bf16.mxu0 0
    %360 = vmatpush2.bf16.msra.mxu0 0
    %361 = vmatprep.subr.bf16.mxu0 0
    %362 = vmatpush2.bf16.msra.mxu0 0
    %363 = vmatprep.mubr.bf16.mxu0 0
    %364 = vmatmul.mubr.bf16.gmra.mxu0 %v262
    %v365 = vpop.f32.mrf.mxu0
    %v366 = vadd.f32 %v282, %v365
    %v367 = vpop.f32.mrf.mxu0
    %v368 = vpop.f32.mrf.mxu0
    %v369 = vadd.f32 %v282, %v368
    %v370 = vpop.f32.mrf.mxu0
    %371 = vdwg.mxu0
    %v372 = vmax.f32 %v366, 0.0
    %v373 = vmax.f32 %v369, 0.0
    %v374 = vpack.c.bf16 %v373, %v372
    %v375 = vld [vmem:[#allocation6] sm:$0xf]
    %v376 = vld [vmem:[#allocation6 + $0x4] sm:$0xf]
    %v377 = vld [vmem:[#allocation6 + $0x8] sm:$0xf]
    %v378 = vld [vmem:[#allocation6 + $0xc] sm:$0xf]
    %v379 = vld [vmem:[#allocation6 + $0x10] sm:$0xf]
    %v380 = vld [vmem:[#allocation6 + $0x14] sm:$0xf]
    %v381 = vld [vmem:[#allocation6 + $0x18] sm:$0xf]
    %v382 = vld [vmem:[#allocation6 + $0x1c] sm:$0xf]
    %v383 = vld [vmem:[#allocation6 + $0x20] sm:$0xf]
    %v384 = vld [vmem:[#allocation6 + $0x24] sm:$0xf]
    %v385 = vld [vmem:[#allocation6 + $0x28] sm:$0xf]
    %v386 = vld [vmem:[#allocation6 + $0x2c] sm:$0xf]
    %v387 = vld [vmem:[#allocation6 + $0x30] sm:$0xf]
    %v388 = vld [vmem:[#allocation6 + $0x34] sm:$0xf]
    %v389 = vld [vmem:[#allocation6 + $0x38] sm:$0xf]
    %v390 = vld [vmem:[#allocation6 + $0x3c] sm:$0xf]
    %v391 = vlaneseq
    %v392 = vshrl.u32 %v391, 7
    %v393 = vsub.s32 1, %v392
    %v394 = vrot.slane %v202, %v393
    %v411 = vunpack.c.l.b16 %v375
    %v412 = vunpack.c.l.b16 %v376
    %v413 = vunpack.c.l.b16 %v377
    %v414 = vunpack.c.l.b16 %v378
    %v415 = vunpack.c.l.b16 %v379
    %v416 = vunpack.c.l.b16 %v380
    %v417 = vunpack.c.l.b16 %v381
    %v418 = vunpack.c.l.b16 %v382
    %v419 = vunpack.c.l.b16 %v383
    %v420 = vunpack.c.l.b16 %v384
    %v421 = vunpack.c.l.b16 %v385
    %v422 = vunpack.c.l.b16 %v386
    %v423 = vunpack.c.l.b16 %v387
    %v424 = vunpack.c.l.b16 %v388
    %v425 = vunpack.c.l.b16 %v389
    %v426 = vunpack.c.l.b16 %v390
    %v427 = vpack.c.b16 %v412, %v411
    %v428 = vpack.c.b16 %v414, %v413
    %v429 = vpack.c.b16 %v416, %v415
    %v430 = vpack.c.b16 %v418, %v417
    %v431 = vpack.c.b16 %v420, %v419
    %v432 = vpack.c.b16 %v422, %v421
    %v433 = vpack.c.b16 %v424, %v423
    %v434 = vpack.c.b16 %v426, %v425
    %443 = vmatprep.subr.bf16.mxu0 0
    %444 = vmatpush1.bf16.msra.mxu0 %v434
    %445 = vmatprep.subr.bf16.mxu0 0
    %446 = vmatpush1.bf16.msra.mxu0 %v433
    %447 = vmatprep.subr.bf16.mxu0 0
    %448 = vmatpush1.bf16.msra.mxu0 %v432
    %449 = vmatprep.subr.bf16.mxu0 0
    %450 = vmatpush1.bf16.msra.mxu0 %v431
    %451 = vmatprep.subr.bf16.mxu0 0
    %452 = vmatpush1.bf16.msra.mxu0 %v430
    %453 = vmatprep.subr.bf16.mxu0 0
    %454 = vmatpush1.bf16.msra.mxu0 %v429
    %455 = vmatprep.subr.bf16.mxu0 0
    %456 = vmatpush1.bf16.msra.mxu0 %v428
    %457 = vmatprep.subr.bf16.mxu0 0
    %458 = vmatpush1.bf16.msra.mxu0 %v427
    %459 = vmatprep.subr.bf16.mxu0 0
    %460 = vmatpush2.bf16.msra.mxu0 0
    %461 = vmatprep.subr.bf16.mxu0 0
    %462 = vmatpush2.bf16.msra.mxu0 0
    %463 = vmatprep.subr.bf16.mxu0 0
    %464 = vmatpush2.bf16.msra.mxu0 0
    %465 = vmatprep.subr.bf16.mxu0 0
    %466 = vmatpush2.bf16.msra.mxu0 0
    %467 = vmatprep.subr.bf16.mxu0 0
    %468 = vmatpush2.bf16.msra.mxu0 0
    %469 = vmatprep.subr.bf16.mxu0 0
    %470 = vmatpush2.bf16.msra.mxu0 0
    %471 = vmatprep.subr.bf16.mxu0 0
    %472 = vmatpush2.bf16.msra.mxu0 0
    %473 = vmatprep.subr.bf16.mxu0 0
    %474 = vmatpush2.bf16.msra.mxu0 0
    %475 = vmatprep.mubr.bf16.mxu0 0
    %476 = vmatmul.mubr.bf16.gmra.mxu0 %v374
    %v477 = vpop.f32.mrf.mxu0
    %v478 = vadd.f32 %v394, %v477
    %v479 = vpop.f32.mrf.mxu0
    %v480 = vpop.f32.mrf.mxu0
    %v481 = vadd.f32 %v394, %v480
    %v482 = vpop.f32.mrf.mxu0
    %483 = vdwg.mxu0
    %v484 = vmax.f32 %v478, 0.0
    %v485 = vmax.f32 %v481, 0.0
    %v486 = vpack.c.bf16 %v485, %v484
    %v487 = vld [vmem:[%s6] sm:$0xf]
    %v488 = vld [vmem:[%s6 + $0x4] sm:$0xf]
    %v489 = vld [vmem:[%s6 + $0x8] sm:$0xf]
    %v490 = vld [vmem:[%s6 + $0xc] sm:$0xf]
    %v491 = vld [vmem:[%s6 + $0x10] sm:$0xf]
    %v492 = vld [vmem:[%s6 + $0x14] sm:$0xf]
    %v493 = vld [vmem:[%s6 + $0x18] sm:$0xf]
    %v494 = vld [vmem:[%s6 + $0x1c] sm:$0xf]
    %v495 = vld [vmem:[%s6 + $0x20] sm:$0xf]
    %v496 = vld [vmem:[%s6 + $0x24] sm:$0xf]
    %v497 = vld [vmem:[%s6 + $0x28] sm:$0xf]
    %v498 = vld [vmem:[%s6 + $0x2c] sm:$0xf]
    %v499 = vld [vmem:[%s6 + $0x30] sm:$0xf]
    %v500 = vld [vmem:[%s6 + $0x34] sm:$0xf]
    %v501 = vld [vmem:[%s6 + $0x38] sm:$0xf]
    %v502 = vld [vmem:[%s6 + $0x3c] sm:$0xf]
    %v503 = vld [vmem:[#allocation9] sm:$0x1]
    %v505 = vlaneseq
    %v506 = vshrl.u32 %v505, 7
    %v507 = vsub.s32 0, %v506
    %v508 = vrot.slane %v503, %v507
    %v526 = vunpack.c.l.b16 %v487
    %v527 = vunpack.c.l.b16 %v488
    %v528 = vunpack.c.l.b16 %v489
    %v529 = vunpack.c.l.b16 %v490
    %v530 = vunpack.c.l.b16 %v491
    %v531 = vunpack.c.l.b16 %v492
    %v532 = vunpack.c.l.b16 %v493
    %v533 = vunpack.c.l.b16 %v494
    %v534 = vunpack.c.l.b16 %v495
    %v535 = vunpack.c.l.b16 %v496
    %v536 = vunpack.c.l.b16 %v497
    %v537 = vunpack.c.l.b16 %v498
    %v538 = vunpack.c.l.b16 %v499
    %v539 = vunpack.c.l.b16 %v500
    %v540 = vunpack.c.l.b16 %v501
    %v541 = vunpack.c.l.b16 %v502
    %v542 = vpack.c.b16 %v527, %v526
    %v543 = vpack.c.b16 %v529, %v528
    %v544 = vpack.c.b16 %v531, %v530
    %v545 = vpack.c.b16 %v533, %v532
    %v546 = vpack.c.b16 %v535, %v534
    %v547 = vpack.c.b16 %v537, %v536
    %v548 = vpack.c.b16 %v539, %v538
    %v549 = vpack.c.b16 %v541, %v540
    %558 = vmatprep.subr.bf16.mxu0 0
    %559 = vmatpush1.bf16.msra.mxu0 %v549
    %560 = vmatprep.subr.bf16.mxu0 0
    %561 = vmatpush1.bf16.msra.mxu0 %v548
    %562 = vmatprep.subr.bf16.mxu0 0
    %563 = vmatpush1.bf16.msra.mxu0 %v547
    %564 = vmatprep.subr.bf16.mxu0 0
    %565 = vmatpush1.bf16.msra.mxu0 %v546
    %566 = vmatprep.subr.bf16.mxu0 0
    %567 = vmatpush1.bf16.msra.mxu0 %v545
    %568 = vmatprep.subr.bf16.mxu0 0
    %569 = vmatpush1.bf16.msra.mxu0 %v544
    %570 = vmatprep.subr.bf16.mxu0 0
    %571 = vmatpush1.bf16.msra.mxu0 %v543
    %572 = vmatprep.subr.bf16.mxu0 0
    %573 = vmatpush1.bf16.msra.mxu0 %v542
    %574 = vmatprep.subr.bf16.mxu0 0
    %575 = vmatpush2.bf16.msra.mxu0 0
    %576 = vmatprep.subr.bf16.mxu0 0
    %577 = vmatpush2.bf16.msra.mxu0 0
    %578 = vmatprep.subr.bf16.mxu0 0
    %579 = vmatpush2.bf16.msra.mxu0 0
    %580 = vmatprep.subr.bf16.mxu0 0
    %581 = vmatpush2.bf16.msra.mxu0 0
    %582 = vmatprep.subr.bf16.mxu0 0
    %583 = vmatpush2.bf16.msra.mxu0 0
    %584 = vmatprep.subr.bf16.mxu0 0
    %585 = vmatpush2.bf16.msra.mxu0 0
    %586 = vmatprep.subr.bf16.mxu0 0
    %587 = vmatpush2.bf16.msra.mxu0 0
    %588 = vmatprep.subr.bf16.mxu0 0
    %589 = vmatpush2.bf16.msra.mxu0 0
    %590 = vmatprep.mubr.bf16.mxu0 0
    %591 = vmatmul.mubr.bf16.gmra.mxu0 %v486
    %v592 = vpop.f32.mrf.mxu0
    %v593 = vadd.f32 %v508, %v592
    %v594 = vpop.f32.mrf.mxu0
    %v595 = vpop.f32.mrf.mxu0
    %v596 = vadd.f32 %v508, %v595
    %v597 = vpop.f32.mrf.mxu0
    %598 = vdwg.mxu0
    %599 = vst.msk [vmem:[%s9] sm:$0xff] %vm211, %v593
    %600 = vst.msk [vmem:[%s9 + $0x8] sm:$0xff] %vm211, %v596
    // Predicated region
    $region58: #{_forward_impl.1} parent=1 // pred_check
      _
    $region59: #{_forward_impl.1} parent=1 // pred_check_branch
      %602 = sbr.rel (0) target = $region61
    $region60: #{_forward_impl.1} parent=1 // pred_region
      _
    $region61: #{_forward_impl.1} parent=1 // pred_fallthru
      _
    // Predicated region
    $region62: #{_forward_impl.1} parent=1 // pred_check
      _
    $region63: #{_forward_impl.1} parent=1 // pred_check_branch
      %604 = sbr.rel (0) target = $region65
    $region64: #{_forward_impl.1} parent=1 // pred_region
      _
    $region65: #{_forward_impl.1} parent=1 // pred_fallthru
      _
    %605 = vsyncpa [#allocation3], 1
    %606 = vsyncpa [#allocation5], 1
    %607 = vsyncpa [#allocation8], 1

</llo_original>
